<compile_context>
chip_gen: v5e
topology: v5e:2x2
jax: 0.10.0
libtpu: 0.0.40
codegen_flags: <defaults>
</compile_context>

<pallas_src>
import math
import functools

import jax
import jax.numpy as jnp
from jax import lax
from jax.experimental import pallas as pl
from jax.experimental.pallas import tpu as pltpu


def _lif_kernel(params_ref, cond_ref, x_ref, out_ref, u_sc):
    """params_ref: (4, R, P) rows = [sig(tau), -sig(Vth), -sig(leak), -sig(reVth)]
                   P is 1 (channel-fold layout) or 128 (per-element layout).
    cond_ref:   (T, R, P)  sigmoid(conduct) for the WHOLE sequence (resident).
    x_ref:      (Tt, R, L) input block (batch dim squeezed by BlockSpec).
    out_ref:    (Tt, R, L) spike output block.
    u_sc:       (R, L)     membrane-potential carry across the serial T axis.

    NOTE: correctness of the u_sc carry requires the time axis to be the LAST
    (innermost, "arbitrary") grid dimension so that tc == 0 runs before any
    other tc for every (b, nt) tile.  Do not reorder the grid.
    """
    tc = pl.program_id(2)          # position along the (serial) time axis
    n_steps = x_ref.shape[0]       # Tt (static)

    # Reset the carried membrane potential at the start of every tile's sequence.
    @pl.when(tc == 0)
    def _():
        u_sc[...] = jnp.zeros_like(u_sc)

    shape = u_sc.shape
    # Hoisted lane-broadcasts (JAX does not CSE broadcast_in_dim; doing these
    # once per grid step instead of once per timestep).
    tau_b = jnp.broadcast_to(params_ref[0], shape)
    nvth_b = jnp.broadcast_to(params_ref[1], shape)     # -sigmoid(Vth)
    nleak_b = jnp.broadcast_to(params_ref[2], shape)    # -sigmoid(leak)
    nrevth_b = jnp.broadcast_to(params_ref[3], shape)   # -sigmoid(reVth)

    u = u_sc[...]
    # o_prev is a pure function of (u, Vth); recompute instead of carrying a
    # second scratch.  At tc == 0, u == 0 and Vth > 0 so o_prev == 0 as required.
    o_mask = (u + nvth_b) > 0.0

    t_base = tc * n_steps

    def one_step(x_t, cond_t, u, o_mask):
        i_t = x_t * cond_t
        # spike branch:    (I - leak) - reVth
        # no-spike branch: (tau*u - leak) + I
        # (bit-identical to the reference evaluation order for o_prev in {0,1})
        u = jnp.where(o_mask,
                      (i_t + nleak_b) + nrevth_b,
                      (tau_b * u + nleak_b) + i_t)
        o_mask = (u + nvth_b) > 0.0
        return u, o_mask

    if n_steps <= 16:
        # short static unroll
        for tt in range(n_steps):
            u, o_mask = one_step(x_ref[tt], cond_ref[t_base + tt], u, o_mask)
            out_ref[tt] = o_mask.astype(out_ref.dtype)
    else:
        def body(tt, carry):
            u, o_mask = carry
            u, o_mask = one_step(x_ref[tt], cond_ref[t_base + tt], u, o_mask)
            out_ref[tt] = o_mask.astype(out_ref.dtype)
            return (u, o_mask)
        u, o_mask = lax.fori_loop(0, n_steps, body, (u, o_mask), unroll=True)

    u_sc[...] = u


def _vmem_budget_bytes():
    """Generation-aware per-kernel VMEM budget (v5e/v6e: 128 MiB phys, v7x: 64 MiB)."""
    try:
        info = pltpu.get_tpu_info()
        cap = int(getattr(info, "vmem_capacity_bytes", 0)) or (64 << 20)
    except Exception:
        cap = 64 << 20  # conservative (v7x per-TC) default
    return max(min(int(cap * 0.7), 96 << 20), 16 << 20)


def lif_spike_cw_softsimple(x, tau_p, vth_p, leak_p, revth_p, cond_p):
    """x: (T, B, C, H, W); raw (pre-sigmoid) per-channel parameters."""
    T, B, C, H, W = x.shape
    HW = H * W
    CHW = C * HW
    sig = jax.nn.sigmoid
    x = x.astype(jnp.float32)

    vmem_budget = _vmem_budget_bytes()
    min_par_tiles = 2 if B == 1 else 1   # engage both TCs (v7x megacore) when B == 1

    # ---------- layout selection ----------
    k = 1
    if C % 8 != 0:
        need = 8 // math.gcd(C, 8)
        if HW % need == 0:
            k = need
    Cf, Nf = C * k, HW // k
    use_fold = (Cf % 8 == 0) and (Nf % 128 == 0)

    tt_divs = [d for d in range(1, T + 1) if T % d == 0 and d <= 64]

    if use_fold:
        # contiguous reshape only; row r of the folded layout <-> channel r // k
        x_k = x.reshape(T, B, Cf, Nf)

        def fold_param(p, neg=False):
            p = sig(p.astype(jnp.float32))
            if neg:
                p = -p
            if k > 1:
                p = jnp.repeat(p, k)
            return p

        params = jnp.stack([fold_param(tau_p),
                            fold_param(vth_p, neg=True),
                            fold_param(leak_p, neg=True),
                            fold_param(revth_p, neg=True)]).reshape(4, Cf, 1)
        cond_k = sig(cond_p.astype(jnp.float32))
        if k > 1:
            cond_k = jnp.repeat(cond_k, k, axis=1)
        cond_k = cond_k.reshape(T, Cf, 1)

        resident_bytes = 2 * 4 * (params.size + cond_k.size) + (2 << 20)

        def fits(tt, tn):
            blk = 4 * tt * Cf * tn        # one x or out block, bytes
            tot = 4 * blk + 4 * Cf * tn + resident_bytes   # dbl-buf x+out, scratch, rest
            return tot <= vmem_budget

        lane_divs = [d for d in range(128, Nf + 1, 128) if Nf % d == 0]
        cand = [d for d in lane_divs if Nf // d >= min_par_tiles and fits(1, d)]
        if not cand:
            cand = [d for d in lane_divs if fits(1, d)]
        if not cand:
            cand = [min(lane_divs)]
        tn = max(cand)                     # full Nf whenever it fits VMEM
        tt_cand = [d for d in tt_divs if fits(d, tn)]
        Tt = max(tt_cand) if tt_cand else 1

        NT = Nf // tn
        Tg = T // Tt
        in_specs = [
            # packed static params, resident (constant block index)
            pl.BlockSpec((4, Cf, 1), lambda b, nt, tc: (0, 0, 0)),
            # whole sigmoid(conduct) table, resident; indexed in-kernel by time
            pl.BlockSpec((T, Cf, 1), lambda b, nt, tc: (0, 0, 0)),
            # Tt steps, one batch element (squeezed), one lane tile
            pl.BlockSpec((Tt, None, Cf, tn), lambda b, nt, tc: (tc, b, 0, nt)),
        ]
        out_spec = pl.BlockSpec((Tt, None, Cf, tn), lambda b, nt, tc: (tc, b, 0, nt))
        scratch = pltpu.VMEM((Cf, tn), jnp.float32)
        out_shape_k = (T, B, Cf, Nf)
    else:
        # Fallback: lane-dense per-element layout for awkward C/H/W.
        LANES = 128
        CHW_pad = ((CHW + 1023) // 1024) * 1024
        pad = CHW_pad - CHW
        Mf = CHW_pad // LANES              # multiple of 8

        x_flat = x.reshape(T, B, CHW)
        if pad:
            x_flat = jnp.pad(x_flat, ((0, 0), (0, 0), (0, pad)))
        x_k = x_flat.reshape(T, B, Mf, LANES)

        def expand(p, neg=False, pad_val=0.0):
            p = sig(p.astype(jnp.float32))
            if neg:
                p = -p
            p = jnp.repeat(p, HW)          # channel-major, matches flatten of (C,H,W)
            if pad:
                p = jnp.pad(p, (0, pad), constant_values=pad_val)
            return p.reshape(Mf, LANES)

        params = jnp.stack([expand(tau_p),
                            expand(vth_p, neg=True, pad_val=-1.0),  # padded cells never spike
                            expand(leak_p, neg=True),
                            expand(revth_p, neg=True)])             # (4, Mf, 128)
        cond_e = jnp.repeat(sig(cond_p.astype(jnp.float32)), HW, axis=1)
        if pad:
            cond_e = jnp.pad(cond_e, ((0, 0), (0, pad)))
        cond_k = cond_e.reshape(T, Mf, LANES)

        def fits(tt, tm):
            blk = 4 * tt * tm * LANES
            tot = 4 * blk + 4 * tm * LANES + 2 * 4 * (4 + T) * tm * LANES + (2 << 20)
            return tot <= vmem_budget

        row_divs = [d for d in range(8, Mf + 1, 8) if Mf % d == 0]
        cand = [d for d in row_divs if Mf // d >= min_par_tiles and fits(1, d)]
        if not cand:
            cand = [d for d in row_divs if fits(1, d)]
        if not cand:
            cand = [min(row_divs)]
        tm = max(cand)
        tt_cand = [d for d in tt_divs if fits(d, tm)]
        Tt = max(tt_cand) if tt_cand else 1

        NT = Mf // tm
        Tg = T // Tt
        in_specs = [
            pl.BlockSpec((4, tm, LANES), lambda b, nt, tc: (0, nt, 0)),
            pl.BlockSpec((T, tm, LANES), lambda b, nt, tc: (0, nt, 0)),
            pl.BlockSpec((Tt, None, tm, LANES), lambda b, nt, tc: (tc, b, nt, 0)),
        ]
        out_spec = pl.BlockSpec((Tt, None, tm, LANES), lambda b, nt, tc: (tc, b, nt, 0))
        scratch = pltpu.VMEM((tm, LANES), jnp.float32)
        out_shape_k = (T, B, Mf, LANES)

    out = pl.pallas_call(
        _lif_kernel,
        out_shape=jax.ShapeDtypeStruct(out_shape_k, jnp.float32),
        grid_spec=pltpu.PrefetchScalarGridSpec(
            num_scalar_prefetch=0,
            # Time axis MUST stay last (serial, "arbitrary") for the u carry.
            grid=(B, NT, Tg),
            in_specs=in_specs,
            out_specs=out_spec,
            scratch_shapes=[scratch],
        ),
        compiler_params=pltpu.CompilerParams(
            dimension_semantics=("parallel", "parallel", "arbitrary"),
            vmem_limit_bytes=int(vmem_budget)),
    )(params, cond_k, x_k)

    if use_fold:
        return out.reshape(T, B, C, H, W)
    out = out.reshape(T, B, CHW_pad)[:, :, :CHW]
    return out.reshape(T, B, C, H, W)


def _reference_forward(x, tau_p, vth_p, leak_p, revth_p, cond_p):
    """Pure-JAX transcription of the PyTorch forward, for verification."""
    T = x.shape[0]
    tau = jax.nn.sigmoid(tau_p)[None, :, None, None]
    vth = jax.nn.sigmoid(vth_p)[None, :, None, None]
    leak = jax.nn.sigmoid(leak_p)[None, :, None, None]
    revth = jax.nn.sigmoid(revth_p)[None, :, None, None]
    u = jnp.zeros(x.shape[1:], jnp.float32)
    o_prev = jnp.zeros(x.shape[1:], jnp.float32)
    outs = []
    for t in range(T):
        cond = jax.nn.sigmoid(cond_p[t])[None, :, None, None]
        i_t = x[t] * cond
        u = tau * u * (1.0 - o_prev) - leak + i_t - revth * o_prev
        o = (u - vth > 0.0).astype(jnp.float32)
        outs.append(o)
        o_prev = o
    return jnp.stack(outs)


if __name__ == "__main__":
    # module hyper-params (matching the PyTorch __init__ kwargs)
    T, B, C, H, W = 8, 2, 4, 16, 16            # plane = C
    param = [0.25, 0.5, 0.2, 0.5]              # tau, Vth(=reVth), leak, conduct

    def inv_sigmoid(p):
        return -math.log(1.0 / p - 1.0)

    # deterministic parameter init, exactly as the nn.Parameters are built
    tau_p = jnp.full((C,), inv_sigmoid(param[0]), jnp.float32)
    vth_p = jnp.full((C,), inv_sigmoid(param[1]), jnp.float32)
    leak_p = jnp.full((C,), inv_sigmoid(param[2]), jnp.float32)
    revth_p = jnp.full((C,), inv_sigmoid(param[1]), jnp.float32)
    cond_p = jnp.full((T, C), inv_sigmoid(param[3]), jnp.float32)
    # TODO(synk): gamma parameter exists in __init__ but is unused in forward; omitted.

    key = jax.random.PRNGKey(0)
    x = jax.random.normal(key, (T, B, C, H, W), jnp.float32)

    out = lif_spike_cw_softsimple(x, tau_p, vth_p, leak_p, revth_p, cond_p)
    out = jax.block_until_ready(out)

    ref = _reference_forward(x, tau_p, vth_p, leak_p, revth_p, cond_p)
    assert out.shape == x.shape
    assert jnp.allclose(out, ref), "Pallas kernel mismatch vs reference"

    print("KERNEL_OK")
</pallas_src>

<mosaic_0001>
module attributes {stable_mosaic.version = 11 : i64} {
  func.func @_lif_kernel(%arg0: i32, %arg1: i32, %arg2: i32, %arg3: memref<4x8x1xf32, #tpu.memory_space<vmem>>, %arg4: memref<8x8x1xf32, #tpu.memory_space<vmem>>, %arg5: memref<8x1x8x128xf32, #tpu.memory_space<vmem>>, %arg6: memref<8x1x8x128xf32, #tpu.memory_space<vmem>>, %arg7: memref<8x128xf32, #tpu.memory_space<vmem>>) attributes {dimension_semantics = [#tpu.dimension_semantics<parallel>, #tpu.dimension_semantics<parallel>, #tpu.dimension_semantics<arbitrary>], iteration_bounds = array<i64: 2, 1, 1>, scalar_prefetch = 0 : i64, scratch_operands = 1 : i64, tpu.core_type = #tpu.core_type<tc>, window_params = [{pipeline_mode = #tpu.pipeline_mode<synchronous>, transform_indices = @transform_0, window_bounds = array<i64: 4, 8, 1>}, {pipeline_mode = #tpu.pipeline_mode<synchronous>, transform_indices = @transform_1, window_bounds = array<i64: 8, 8, 1>}, {transform_indices = @transform_2, window_bounds = array<i64: 8, 1, 8, 128>}, {transform_indices = @transform_3, window_bounds = array<i64: 8, 1, 8, 128>}]} {
    %c0_i32 = arith.constant 0 : i32
    %0 = arith.cmpi eq, %arg2, %c0_i32 : i32
    %1 = arith.extui %0 : i1 to i32
    %c0_i32_0 = arith.constant 0 : i32
    %2 = arith.cmpi ne, %1, %c0_i32_0 : i32
    scf.if %2 {
      %cst_98 = arith.constant 0.000000e+00 : f32
      %201 = vector.broadcast %cst_98 : f32 to vector<8x128xf32>
      %c0_99 = arith.constant 0 : index
      %c0_100 = arith.constant 0 : index
      %202 = vector.load %arg7[%c0_99, %c0_100] : memref<8x128xf32, #tpu.memory_space<vmem>>, vector<8x128xf32>
      tpu.vector_store %arg7[%c0_99, %c0_100], %201 {strides = array<i32>} : memref<8x128xf32, #tpu.memory_space<vmem>>, vector<8x128xf32>,
    } else {
    }
    %c0 = arith.constant 0 : index
    %c0_1 = arith.constant 0 : index
    %c0_2 = arith.constant 0 : index
    %3 = vector.load %arg3[%c0, %c0_1, %c0_2] : memref<4x8x1xf32, #tpu.memory_space<vmem>>, vector<1x8x1xf32>
    %4 = vector.shape_cast %3 : vector<1x8x1xf32> to vector<8x1xf32>
    %5 = vector.shape_cast %4 : vector<8x1xf32> to vector<8x1xf32>
    %6 = vector.broadcast %5 : vector<8x1xf32> to vector<8x128xf32>
    %c1 = arith.constant 1 : index
    %c0_3 = arith.constant 0 : index
    %c0_4 = arith.constant 0 : index
    %7 = vector.load %arg3[%c1, %c0_3, %c0_4] : memref<4x8x1xf32, #tpu.memory_space<vmem>>, vector<1x8x1xf32>
    %8 = vector.shape_cast %7 : vector<1x8x1xf32> to vector<8x1xf32>
    %9 = vector.shape_cast %8 : vector<8x1xf32> to vector<8x1xf32>
    %10 = vector.broadcast %9 : vector<8x1xf32> to vector<8x128xf32>
    %c2 = arith.constant 2 : index
    %c0_5 = arith.constant 0 : index
    %c0_6 = arith.constant 0 : index
    %11 = vector.load %arg3[%c2, %c0_5, %c0_6] : memref<4x8x1xf32, #tpu.memory_space<vmem>>, vector<1x8x1xf32>
    %12 = vector.shape_cast %11 : vector<1x8x1xf32> to vector<8x1xf32>
    %13 = vector.shape_cast %12 : vector<8x1xf32> to vector<8x1xf32>
    %14 = vector.broadcast %13 : vector<8x1xf32> to vector<8x128xf32>
    %c3 = arith.constant 3 : index
    %c0_7 = arith.constant 0 : index
    %c0_8 = arith.constant 0 : index
    %15 = vector.load %arg3[%c3, %c0_7, %c0_8] : memref<4x8x1xf32, #tpu.memory_space<vmem>>, vector<1x8x1xf32>
    %16 = vector.shape_cast %15 : vector<1x8x1xf32> to vector<8x1xf32>
    %17 = vector.shape_cast %16 : vector<8x1xf32> to vector<8x1xf32>
    %18 = vector.broadcast %17 : vector<8x1xf32> to vector<8x128xf32>
    %c0_9 = arith.constant 0 : index
    %c0_10 = arith.constant 0 : index
    %19 = vector.load %arg7[%c0_9, %c0_10] : memref<8x128xf32, #tpu.memory_space<vmem>>, vector<8x128xf32>
    %20 = arith.addf %19, %10 : vector<8x128xf32>
    %cst = arith.constant 0.000000e+00 : f32
    %21 = vector.broadcast %cst : f32 to vector<8x128xf32>
    %22 = arith.cmpf ogt, %20, %21 : vector<8x128xf32>
    %c8_i32 = arith.constant 8 : i32
    %23 = arith.muli %arg2, %c8_i32 : i32
    %c0_11 = arith.constant 0 : index
    %c0_12 = arith.constant 0 : index
    %c0_13 = arith.constant 0 : index
    %c0_14 = arith.constant 0 : index
    %24 = vector.load %arg5[%c0_11, %c0_12, %c0_13, %c0_14] : memref<8x1x8x128xf32, #tpu.memory_space<vmem>>, vector<1x1x8x128xf32>
    %25 = vector.shape_cast %24 : vector<1x1x8x128xf32> to vector<8x128xf32>
    %c0_i32_15 = arith.constant 0 : i32
    %26 = arith.addi %23, %c0_i32_15 : i32
    %27 = arith.index_cast %26 : i32 to index
    %c0_16 = arith.constant 0 : index
    %c0_17 = arith.constant 0 : index
    %28 = vector.load %arg4[%27, %c0_16, %c0_17] : memref<8x8x1xf32, #tpu.memory_space<vmem>>, vector<1x8x1xf32>
    %29 = vector.shape_cast %28 : vector<1x8x1xf32> to vector<8x1xf32>
    %30 = vector.broadcast %29 : vector<8x1xf32> to vector<8x128xf32>
    %31 = arith.mulf %25, %30 : vector<8x128xf32>
    %32 = arith.addf %31, %14 : vector<8x128xf32>
    %33 = arith.addf %32, %18 : vector<8x128xf32>
    %34 = arith.mulf %6, %19 : vector<8x128xf32>
    %35 = arith.addf %34, %14 : vector<8x128xf32>
    %36 = arith.addf %35, %31 : vector<8x128xf32>
    %37 = arith.select %22, %33, %36 : vector<8x128xi1>, vector<8x128xf32>
    %38 = arith.addf %37, %10 : vector<8x128xf32>
    %cst_18 = arith.constant 0.000000e+00 : f32
    %39 = vector.broadcast %cst_18 : f32 to vector<8x128xf32>
    %40 = arith.cmpf ogt, %38, %39 : vector<8x128xf32>
    %41 = arith.extui %40 : vector<8x128xi1> to vector<8x128xi32>
    %42 = arith.sitofp %41 : vector<8x128xi32> to vector<8x128xf32>
    %c0_19 = arith.constant 0 : index
    %c0_20 = arith.constant 0 : index
    %c0_21 = arith.constant 0 : index
    %c0_22 = arith.constant 0 : index
    %43 = vector.load %arg6[%c0_19, %c0_20, %c0_21, %c0_22] : memref<8x1x8x128xf32, #tpu.memory_space<vmem>>, vector<1x1x8x128xf32>
    %44 = vector.shape_cast %43 : vector<1x1x8x128xf32> to vector<8x128xf32>
    %45 = vector.shape_cast %42 : vector<8x128xf32> to vector<1x1x8x128xf32>
    tpu.vector_store %arg6[%c0_19, %c0_20, %c0_21, %c0_22], %45 {strides = array<i32>} : memref<8x1x8x128xf32, #tpu.memory_space<vmem>>, vector<1x1x8x128xf32>,
    %c1_23 = arith.constant 1 : index
    %c0_24 = arith.constant 0 : index
    %c0_25 = arith.constant 0 : index
    %c0_26 = arith.constant 0 : index
    %46 = vector.load %arg5[%c1_23, %c0_24, %c0_25, %c0_26] : memref<8x1x8x128xf32, #tpu.memory_space<vmem>>, vector<1x1x8x128xf32>
    %47 = vector.shape_cast %46 : vector<1x1x8x128xf32> to vector<8x128xf32>
    %c1_i32 = arith.constant 1 : i32
    %48 = arith.addi %23, %c1_i32 : i32
    %49 = arith.index_cast %48 : i32 to index
    %c0_27 = arith.constant 0 : index
    %c0_28 = arith.constant 0 : index
    %50 = vector.load %arg4[%49, %c0_27, %c0_28] : memref<8x8x1xf32, #tpu.memory_space<vmem>>, vector<1x8x1xf32>
    %51 = vector.shape_cast %50 : vector<1x8x1xf32> to vector<8x1xf32>
    %52 = vector.broadcast %51 : vector<8x1xf32> to vector<8x128xf32>
    %53 = arith.mulf %47, %52 : vector<8x128xf32>
    %54 = arith.addf %53, %14 : vector<8x128xf32>
    %55 = arith.addf %54, %18 : vector<8x128xf32>
    %56 = arith.mulf %6, %37 : vector<8x128xf32>
    %57 = arith.addf %56, %14 : vector<8x128xf32>
    %58 = arith.addf %57, %53 : vector<8x128xf32>
    %59 = arith.select %40, %55, %58 : vector<8x128xi1>, vector<8x128xf32>
    %60 = arith.addf %59, %10 : vector<8x128xf32>
    %cst_29 = arith.constant 0.000000e+00 : f32
    %61 = vector.broadcast %cst_29 : f32 to vector<8x128xf32>
    %62 = arith.cmpf ogt, %60, %61 : vector<8x128xf32>
    %63 = arith.extui %62 : vector<8x128xi1> to vector<8x128xi32>
    %64 = arith.sitofp %63 : vector<8x128xi32> to vector<8x128xf32>
    %c1_30 = arith.constant 1 : index
    %c0_31 = arith.constant 0 : index
    %c0_32 = arith.constant 0 : index
    %c0_33 = arith.constant 0 : index
    %65 = vector.load %arg6[%c1_30, %c0_31, %c0_32, %c0_33] : memref<8x1x8x128xf32, #tpu.memory_space<vmem>>, vector<1x1x8x128xf32>
    %66 = vector.shape_cast %65 : vector<1x1x8x128xf32> to vector<8x128xf32>
    %67 = vector.shape_cast %64 : vector<8x128xf32> to vector<1x1x8x128xf32>
    tpu.vector_store %arg6[%c1_30, %c0_31, %c0_32, %c0_33], %67 {strides = array<i32>} : memref<8x1x8x128xf32, #tpu.memory_space<vmem>>, vector<1x1x8x128xf32>,
    %c2_34 = arith.constant 2 : index
    %c0_35 = arith.constant 0 : index
    %c0_36 = arith.constant 0 : index
    %c0_37 = arith.constant 0 : index
    %68 = vector.load %arg5[%c2_34, %c0_35, %c0_36, %c0_37] : memref<8x1x8x128xf32, #tpu.memory_space<vmem>>, vector<1x1x8x128xf32>
    %69 = vector.shape_cast %68 : vector<1x1x8x128xf32> to vector<8x128xf32>
    %c2_i32 = arith.constant 2 : i32
    %70 = arith.addi %23, %c2_i32 : i32
    %71 = arith.index_cast %70 : i32 to index
    %c0_38 = arith.constant 0 : index
    %c0_39 = arith.constant 0 : index
    %72 = vector.load %arg4[%71, %c0_38, %c0_39] : memref<8x8x1xf32, #tpu.memory_space<vmem>>, vector<1x8x1xf32>
    %73 = vector.shape_cast %72 : vector<1x8x1xf32> to vector<8x1xf32>
    %74 = vector.broadcast %73 : vector<8x1xf32> to vector<8x128xf32>
    %75 = arith.mulf %69, %74 : vector<8x128xf32>
    %76 = arith.addf %75, %14 : vector<8x128xf32>
    %77 = arith.addf %76, %18 : vector<8x128xf32>
    %78 = arith.mulf %6, %59 : vector<8x128xf32>
    %79 = arith.addf %78, %14 : vector<8x128xf32>
    %80 = arith.addf %79, %75 : vector<8x128xf32>
    %81 = arith.select %62, %77, %80 : vector<8x128xi1>, vector<8x128xf32>
    %82 = arith.addf %81, %10 : vector<8x128xf32>
    %cst_40 = arith.constant 0.000000e+00 : f32
    %83 = vector.broadcast %cst_40 : f32 to vector<8x128xf32>
    %84 = arith.cmpf ogt, %82, %83 : vector<8x128xf32>
    %85 = arith.extui %84 : vector<8x128xi1> to vector<8x128xi32>
    %86 = arith.sitofp %85 : vector<8x128xi32> to vector<8x128xf32>
    %c2_41 = arith.constant 2 : index
    %c0_42 = arith.constant 0 : index
    %c0_43 = arith.constant 0 : index
    %c0_44 = arith.constant 0 : index
    %87 = vector.load %arg6[%c2_41, %c0_42, %c0_43, %c0_44] : memref<8x1x8x128xf32, #tpu.memory_space<vmem>>, vector<1x1x8x128xf32>
    %88 = vector.shape_cast %87 : vector<1x1x8x128xf32> to vector<8x128xf32>
    %89 = vector.shape_cast %86 : vector<8x128xf32> to vector<1x1x8x128xf32>
    tpu.vector_store %arg6[%c2_41, %c0_42, %c0_43, %c0_44], %89 {strides = array<i32>} : memref<8x1x8x128xf32, #tpu.memory_space<vmem>>, vector<1x1x8x128xf32>,
    %c3_45 = arith.constant 3 : index
    %c0_46 = arith.constant 0 : index
    %c0_47 = arith.constant 0 : index
    %c0_48 = arith.constant 0 : index
    %90 = vector.load %arg5[%c3_45, %c0_46, %c0_47, %c0_48] : memref<8x1x8x128xf32, #tpu.memory_space<vmem>>, vector<1x1x8x128xf32>
    %91 = vector.shape_cast %90 : vector<1x1x8x128xf32> to vector<8x128xf32>
    %c3_i32 = arith.constant 3 : i32
    %92 = arith.addi %23, %c3_i32 : i32
    %93 = arith.index_cast %92 : i32 to index
    %c0_49 = arith.constant 0 : index
    %c0_50 = arith.constant 0 : index
    %94 = vector.load %arg4[%93, %c0_49, %c0_50] : memref<8x8x1xf32, #tpu.memory_space<vmem>>, vector<1x8x1xf32>
    %95 = vector.shape_cast %94 : vector<1x8x1xf32> to vector<8x1xf32>
    %96 = vector.broadcast %95 : vector<8x1xf32> to vector<8x128xf32>
    %97 = arith.mulf %91, %96 : vector<8x128xf32>
    %98 = arith.addf %97, %14 : vector<8x128xf32>
    %99 = arith.addf %98, %18 : vector<8x128xf32>
    %100 = arith.mulf %6, %81 : vector<8x128xf32>
    %101 = arith.addf %100, %14 : vector<8x128xf32>
    %102 = arith.addf %101, %97 : vector<8x128xf32>
    %103 = arith.select %84, %99, %102 : vector<8x128xi1>, vector<8x128xf32>
    %104 = arith.addf %103, %10 : vector<8x128xf32>
    %cst_51 = arith.constant 0.000000e+00 : f32
    %105 = vector.broadcast %cst_51 : f32 to vector<8x128xf32>
    %106 = arith.cmpf ogt, %104, %105 : vector<8x128xf32>
    %107 = arith.extui %106 : vector<8x128xi1> to vector<8x128xi32>
    %108 = arith.sitofp %107 : vector<8x128xi32> to vector<8x128xf32>
    %c3_52 = arith.constant 3 : index
    %c0_53 = arith.constant 0 : index
    %c0_54 = arith.constant 0 : index
    %c0_55 = arith.constant 0 : index
    %109 = vector.load %arg6[%c3_52, %c0_53, %c0_54, %c0_55] : memref<8x1x8x128xf32, #tpu.memory_space<vmem>>, vector<1x1x8x128xf32>
    %110 = vector.shape_cast %109 : vector<1x1x8x128xf32> to vector<8x128xf32>
    %111 = vector.shape_cast %108 : vector<8x128xf32> to vector<1x1x8x128xf32>
    tpu.vector_store %arg6[%c3_52, %c0_53, %c0_54, %c0_55], %111 {strides = array<i32>} : memref<8x1x8x128xf32, #tpu.memory_space<vmem>>, vector<1x1x8x128xf32>,
    %c4 = arith.constant 4 : index
    %c0_56 = arith.constant 0 : index
    %c0_57 = arith.constant 0 : index
    %c0_58 = arith.constant 0 : index
    %112 = vector.load %arg5[%c4, %c0_56, %c0_57, %c0_58] : memref<8x1x8x128xf32, #tpu.memory_space<vmem>>, vector<1x1x8x128xf32>
    %113 = vector.shape_cast %112 : vector<1x1x8x128xf32> to vector<8x128xf32>
    %c4_i32 = arith.constant 4 : i32
    %114 = arith.addi %23, %c4_i32 : i32
    %115 = arith.index_cast %114 : i32 to index
    %c0_59 = arith.constant 0 : index
    %c0_60 = arith.constant 0 : index
    %116 = vector.load %arg4[%115, %c0_59, %c0_60] : memref<8x8x1xf32, #tpu.memory_space<vmem>>, vector<1x8x1xf32>
    %117 = vector.shape_cast %116 : vector<1x8x1xf32> to vector<8x1xf32>
    %118 = vector.broadcast %117 : vector<8x1xf32> to vector<8x128xf32>
    %119 = arith.mulf %113, %118 : vector<8x128xf32>
    %120 = arith.addf %119, %14 : vector<8x128xf32>
    %121 = arith.addf %120, %18 : vector<8x128xf32>
    %122 = arith.mulf %6, %103 : vector<8x128xf32>
    %123 = arith.addf %122, %14 : vector<8x128xf32>
    %124 = arith.addf %123, %119 : vector<8x128xf32>
    %125 = arith.select %106, %121, %124 : vector<8x128xi1>, vector<8x128xf32>
    %126 = arith.addf %125, %10 : vector<8x128xf32>
    %cst_61 = arith.constant 0.000000e+00 : f32
    %127 = vector.broadcast %cst_61 : f32 to vector<8x128xf32>
    %128 = arith.cmpf ogt, %126, %127 : vector<8x128xf32>
    %129 = arith.extui %128 : vector<8x128xi1> to vector<8x128xi32>
    %130 = arith.sitofp %129 : vector<8x128xi32> to vector<8x128xf32>
    %c4_62 = arith.constant 4 : index
    %c0_63 = arith.constant 0 : index
    %c0_64 = arith.constant 0 : index
    %c0_65 = arith.constant 0 : index
    %131 = vector.load %arg6[%c4_62, %c0_63, %c0_64, %c0_65] : memref<8x1x8x128xf32, #tpu.memory_space<vmem>>, vector<1x1x8x128xf32>
    %132 = vector.shape_cast %131 : vector<1x1x8x128xf32> to vector<8x128xf32>
    %133 = vector.shape_cast %130 : vector<8x128xf32> to vector<1x1x8x128xf32>
    tpu.vector_store %arg6[%c4_62, %c0_63, %c0_64, %c0_65], %133 {strides = array<i32>} : memref<8x1x8x128xf32, #tpu.memory_space<vmem>>, vector<1x1x8x128xf32>,
    %c5 = arith.constant 5 : index
    %c0_66 = arith.constant 0 : index
    %c0_67 = arith.constant 0 : index
    %c0_68 = arith.constant 0 : index
    %134 = vector.load %arg5[%c5, %c0_66, %c0_67, %c0_68] : memref<8x1x8x128xf32, #tpu.memory_space<vmem>>, vector<1x1x8x128xf32>
    %135 = vector.shape_cast %134 : vector<1x1x8x128xf32> to vector<8x128xf32>
    %c5_i32 = arith.constant 5 : i32
    %136 = arith.addi %23, %c5_i32 : i32
    %137 = arith.index_cast %136 : i32 to index
    %c0_69 = arith.constant 0 : index
    %c0_70 = arith.constant 0 : index
    %138 = vector.load %arg4[%137, %c0_69, %c0_70] : memref<8x8x1xf32, #tpu.memory_space<vmem>>, vector<1x8x1xf32>
    %139 = vector.shape_cast %138 : vector<1x8x1xf32> to vector<8x1xf32>
    %140 = vector.broadcast %139 : vector<8x1xf32> to vector<8x128xf32>
    %141 = arith.mulf %135, %140 : vector<8x128xf32>
    %142 = arith.addf %141, %14 : vector<8x128xf32>
    %143 = arith.addf %142, %18 : vector<8x128xf32>
    %144 = arith.mulf %6, %125 : vector<8x128xf32>
    %145 = arith.addf %144, %14 : vector<8x128xf32>
    %146 = arith.addf %145, %141 : vector<8x128xf32>
    %147 = arith.select %128, %143, %146 : vector<8x128xi1>, vector<8x128xf32>
    %148 = arith.addf %147, %10 : vector<8x128xf32>
    %cst_71 = arith.constant 0.000000e+00 : f32
    %149 = vector.broadcast %cst_71 : f32 to vector<8x128xf32>
    %150 = arith.cmpf ogt, %148, %149 : vector<8x128xf32>
    %151 = arith.extui %150 : vector<8x128xi1> to vector<8x128xi32>
    %152 = arith.sitofp %151 : vector<8x128xi32> to vector<8x128xf32>
    %c5_72 = arith.constant 5 : index
    %c0_73 = arith.constant 0 : index
    %c0_74 = arith.constant 0 : index
    %c0_75 = arith.constant 0 : index
    %153 = vector.load %arg6[%c5_72, %c0_73, %c0_74, %c0_75] : memref<8x1x8x128xf32, #tpu.memory_space<vmem>>, vector<1x1x8x128xf32>
    %154 = vector.shape_cast %153 : vector<1x1x8x128xf32> to vector<8x128xf32>
    %155 = vector.shape_cast %152 : vector<8x128xf32> to vector<1x1x8x128xf32>
    tpu.vector_store %arg6[%c5_72, %c0_73, %c0_74, %c0_75], %155 {strides = array<i32>} : memref<8x1x8x128xf32, #tpu.memory_space<vmem>>, vector<1x1x8x128xf32>,
    %c6 = arith.constant 6 : index
    %c0_76 = arith.constant 0 : index
    %c0_77 = arith.constant 0 : index
    %c0_78 = arith.constant 0 : index
    %156 = vector.load %arg5[%c6, %c0_76, %c0_77, %c0_78] : memref<8x1x8x128xf32, #tpu.memory_space<vmem>>, vector<1x1x8x128xf32>
    %157 = vector.shape_cast %156 : vector<1x1x8x128xf32> to vector<8x128xf32>
    %c6_i32 = arith.constant 6 : i32
    %158 = arith.addi %23, %c6_i32 : i32
    %159 = arith.index_cast %158 : i32 to index
    %c0_79 = arith.constant 0 : index
    %c0_80 = arith.constant 0 : index
    %160 = vector.load %arg4[%159, %c0_79, %c0_80] : memref<8x8x1xf32, #tpu.memory_space<vmem>>, vector<1x8x1xf32>
    %161 = vector.shape_cast %160 : vector<1x8x1xf32> to vector<8x1xf32>
    %162 = vector.broadcast %161 : vector<8x1xf32> to vector<8x128xf32>
    %163 = arith.mulf %157, %162 : vector<8x128xf32>
    %164 = arith.addf %163, %14 : vector<8x128xf32>
    %165 = arith.addf %164, %18 : vector<8x128xf32>
    %166 = arith.mulf %6, %147 : vector<8x128xf32>
    %167 = arith.addf %166, %14 : vector<8x128xf32>
    %168 = arith.addf %167, %163 : vector<8x128xf32>
    %169 = arith.select %150, %165, %168 : vector<8x128xi1>, vector<8x128xf32>
    %170 = arith.addf %169, %10 : vector<8x128xf32>
    %cst_81 = arith.constant 0.000000e+00 : f32
    %171 = vector.broadcast %cst_81 : f32 to vector<8x128xf32>
    %172 = arith.cmpf ogt, %170, %171 : vector<8x128xf32>
    %173 = arith.extui %172 : vector<8x128xi1> to vector<8x128xi32>
    %174 = arith.sitofp %173 : vector<8x128xi32> to vector<8x128xf32>
    %c6_82 = arith.constant 6 : index
    %c0_83 = arith.constant 0 : index
    %c0_84 = arith.constant 0 : index
    %c0_85 = arith.constant 0 : index
    %175 = vector.load %arg6[%c6_82, %c0_83, %c0_84, %c0_85] : memref<8x1x8x128xf32, #tpu.memory_space<vmem>>, vector<1x1x8x128xf32>
    %176 = vector.shape_cast %175 : vector<1x1x8x128xf32> to vector<8x128xf32>
    %177 = vector.shape_cast %174 : vector<8x128xf32> to vector<1x1x8x128xf32>
    tpu.vector_store %arg6[%c6_82, %c0_83, %c0_84, %c0_85], %177 {strides = array<i32>} : memref<8x1x8x128xf32, #tpu.memory_space<vmem>>, vector<1x1x8x128xf32>,
    %c7 = arith.constant 7 : index
    %c0_86 = arith.constant 0 : index
    %c0_87 = arith.constant 0 : index
    %c0_88 = arith.constant 0 : index
    %178 = vector.load %arg5[%c7, %c0_86, %c0_87, %c0_88] : memref<8x1x8x128xf32, #tpu.memory_space<vmem>>, vector<1x1x8x128xf32>
    %179 = vector.shape_cast %178 : vector<1x1x8x128xf32> to vector<8x128xf32>
    %c7_i32 = arith.constant 7 : i32
    %180 = arith.addi %23, %c7_i32 : i32
    %181 = arith.index_cast %180 : i32 to index
    %c0_89 = arith.constant 0 : index
    %c0_90 = arith.constant 0 : index
    %182 = vector.load %arg4[%181, %c0_89, %c0_90] : memref<8x8x1xf32, #tpu.memory_space<vmem>>, vector<1x8x1xf32>
    %183 = vector.shape_cast %182 : vector<1x8x1xf32> to vector<8x1xf32>
    %184 = vector.broadcast %183 : vector<8x1xf32> to vector<8x128xf32>
    %185 = arith.mulf %179, %184 : vector<8x128xf32>
    %186 = arith.addf %185, %14 : vector<8x128xf32>
    %187 = arith.addf %186, %18 : vector<8x128xf32>
    %188 = arith.mulf %6, %169 : vector<8x128xf32>
    %189 = arith.addf %188, %14 : vector<8x128xf32>
    %190 = arith.addf %189, %185 : vector<8x128xf32>
    %191 = arith.select %172, %187, %190 : vector<8x128xi1>, vector<8x128xf32>
    %192 = arith.addf %191, %10 : vector<8x128xf32>
    %cst_91 = arith.constant 0.000000e+00 : f32
    %193 = vector.broadcast %cst_91 : f32 to vector<8x128xf32>
    %194 = arith.cmpf ogt, %192, %193 : vector<8x128xf32>
    %195 = arith.extui %194 : vector<8x128xi1> to vector<8x128xi32>
    %196 = arith.sitofp %195 : vector<8x128xi32> to vector<8x128xf32>
    %c7_92 = arith.constant 7 : index
    %c0_93 = arith.constant 0 : index
    %c0_94 = arith.constant 0 : index
    %c0_95 = arith.constant 0 : index
    %197 = vector.load %arg6[%c7_92, %c0_93, %c0_94, %c0_95] : memref<8x1x8x128xf32, #tpu.memory_space<vmem>>, vector<1x1x8x128xf32>
    %198 = vector.shape_cast %197 : vector<1x1x8x128xf32> to vector<8x128xf32>
    %199 = vector.shape_cast %196 : vector<8x128xf32> to vector<1x1x8x128xf32>
    tpu.vector_store %arg6[%c7_92, %c0_93, %c0_94, %c0_95], %199 {strides = array<i32>} : memref<8x1x8x128xf32, #tpu.memory_space<vmem>>, vector<1x1x8x128xf32>,
    %c0_96 = arith.constant 0 : index
    %c0_97 = arith.constant 0 : index
    %200 = vector.load %arg7[%c0_96, %c0_97] : memref<8x128xf32, #tpu.memory_space<vmem>>, vector<8x128xf32>
    tpu.vector_store %arg7[%c0_96, %c0_97], %191 {strides = array<i32>} : memref<8x128xf32, #tpu.memory_space<vmem>>, vector<8x128xf32>,
    return
  }
  func.func @transform_0(%arg0: i32, %arg1: i32, %arg2: i32) -> (i32, i32, i32) {
    %c0_i32 = arith.constant 0 : i32
    %c0_i32_0 = arith.constant 0 : i32
    %c0_i32_1 = arith.constant 0 : i32
    %c0_i32_2 = arith.constant 0 : i32
    return %c0_i32, %c0_i32_0, %c0_i32_1 : i32, i32, i32
  }
  func.func @transform_1(%arg0: i32, %arg1: i32, %arg2: i32) -> (i32, i32, i32) {
    %c0_i32 = arith.constant 0 : i32
    %c0_i32_0 = arith.constant 0 : i32
    %c0_i32_1 = arith.constant 0 : i32
    %c0_i32_2 = arith.constant 0 : i32
    return %c0_i32, %c0_i32_0, %c0_i32_1 : i32, i32, i32
  }
  func.func @transform_2(%arg0: i32, %arg1: i32, %arg2: i32) -> (i32, i32, i32, i32) {
    %c0_i32 = arith.constant 0 : i32
    %c0_i32_0 = arith.constant 0 : i32
    return %arg2, %arg0, %c0_i32, %arg1 : i32, i32, i32, i32
  }
  func.func @transform_3(%arg0: i32, %arg1: i32, %arg2: i32) -> (i32, i32, i32, i32) {
    %c0_i32 = arith.constant 0 : i32
    %c0_i32_0 = arith.constant 0 : i32
    return %arg2, %arg0, %c0_i32, %arg1 : i32, i32, i32, i32
  }
}

</mosaic_0001>

<llo_original>
// kernel: tpu_custom_call.1
$region0: #{tpu_custom_call.1}
  #allocation0 [shape = 'u32[]', space=smem, size = 0x4, offset = 0x4, fixed_abs, tag = 'smem constant byte address 0x4 - core index']
  #allocation1 [shape = 'u32[72,128]{1,0:T(1,128)}', space=vmem, size = 0x9000, scoped, tag = 'internal scratch']
  #allocation2 [shape = 'f32[8,128]{1,0:T(8,128)}', space=vmem, size = 0x1000, scoped, tag = 'scratch operand']
  %s0 = inlined_call_operand.vmem [shape: f32[4,8,1], index: 0, kind: input, shape index: {}]
  %s1 = inlined_call_operand.vmem [shape: f32[8,8,1], index: 1, kind: input, shape index: {}]
  %s2 = inlined_call_operand.hbm [shape: f32[8,2,8,128], index: 2, kind: input, shape index: {}]
  %s3 = inlined_call_operand.hbm [shape: f32[8,2,8,128], index: 3, kind: output, shape index: {}]
  %s4 = sld [smem:[#allocation0]]
  $region53: #{tpu_custom_call.1} parent=0
    _
  %s6 = ssub.s32 1, %s4
  %s7 = scalar_select 0, %s6, %s4
  $region1: #{tpu_custom_call.1} parent=0
    #allocation3 [shape = 'u8[65536]{0}', space=vmem, size = 0x10000, scoped, tag = 'input window, operand 2']
    #allocation4 [shape = 's32[2]{0}', space=sflag, size = 0x8, scoped, tag = 'scoped memory for tpu_custom_call.1']
    #allocation5 [shape = 's32[2]{0}', space=sflag, size = 0x8, scoped, tag = 'scoped memory for tpu_custom_call.1']
    #allocation6 [shape = 'u8[65536]{0}', space=vmem, size = 0x10000, scoped, tag = 'output window, operand 0']
    %8 = vsyncpa [#allocation4], 0
    %s9 = scalar_lea.sflag [#allocation4], 1
    %10 = vsyncpa %s9, 0
    %11 = vsyncpa [#allocation5], 0
    %s12 = scalar_lea.sflag [#allocation5], 1
    %13 = vsyncpa %s12, 0
    loop: start=0, step=1, limit=4
    $region2: #{tpu_custom_call.1} parent=1 // loop_pre_header
      _
    $region3: #{tpu_custom_call.1} parent=1 // loop_header
      %s15 = sphi 0, %s19
      %p16 = scmp.ge.s32.totalorder %s15, 4
      %s22 = sphi 0, %s41
      %s23 = sphi 0, %s37
      %s24 = sphi 0, %s33
      %s25 = sphi 0, %s22
      %s26 = sphi 0, %s23
      %s27 = sphi 0, %s24
      %s28 = sphi 0, %s25
      %s29 = sphi 0, %s26
      %s30 = sphi 0, %s27
      %s42 = sphi 0, %s42
      %s44 = sphi 0, %s42
      %s45 = sphi 0, %s44
      %s59 = sphi 0, %s45
      %s63 = sphi 0, %s63
      %s65 = sphi 0, %s63
      %s66 = sphi 0, %s65
      %s80 = sphi 0, %s66
      %s90 = sphi 0, %s92
      %s93 = sphi 0, %s90
      %s94 = sphi 0, %s93
      %s110 = sphi 0, %s94
      %s120 = sphi 0, %s122
      %s123 = sphi 0, %s120
      %s124 = sphi 0, %s123
      %s140 = sphi 0, %s124
    $region4: #{tpu_custom_call.1} parent=1 // loop_header_branch
      %18 = sbr.rel (%p16) target = $region8
    $region5: #{tpu_custom_call.1} parent=1 // loop_body
      %s20 = ssub.s32 %s15, 1
      %s21 = ssub.s32 %s15, 2
      %s31 = sadd.s32 1, %s24
      %p32 = scmp.ge.s32.totalorder %s31, 1
      %s33 = scalar_select %p32, 0, %s31
      %s34 = sadd.s32 1, %s23
      %s35 = scalar_select %p32, %s34, %s23
      %p36 = scmp.ge.s32.totalorder %s35, 1
      %s37 = scalar_select %p36, 0, %s35
      %s38 = sadd.s32 1, %s22
      %s39 = scalar_select %p36, %s38, %s22
      %p40 = scmp.ge.s32.totalorder %s39, 2
      %s41 = scalar_select %p40, 0, %s39
      %s43 = sadd.s32 %s42, 1
      %p46 = scmp.eq.s32.totalorder %s15, 1
      %p47 = scmp.ne.s32.totalorder %s42, %s44
      %p48 = scmp.eq.s32.totalorder %s15, 0
      %p49 = por %p47, %p48
      %p50 = scmp.ne.s32.totalorder %s42, %s44
      %p51 = scmp.eq.s32.totalorder %s20, 1
      %p52 = por %p50, %p51
      %p53 = scmp.ne.s32.totalorder %s44, %s45
      %p54 = scmp.eq.s32.totalorder %s20, 0
      %p55 = por %p53, %p54
      %p56 = scmp.ne.s32.totalorder %s44, %s45
      %p57 = scmp.eq.s32.totalorder %s21, 1
      %p58 = por %p56, %p57
      %p60 = scmp.ne.s32.totalorder %s45, %s59
      %p61 = scmp.eq.s32.totalorder %s21, 0
      %p62 = por %p60, %p61
      %s64 = sadd.s32 %s63, 1
      %p67 = scmp.eq.s32.totalorder %s15, 1
      %p68 = scmp.ne.s32.totalorder %s63, %s65
      %p69 = scmp.eq.s32.totalorder %s15, 0
      %p70 = por %p68, %p69
      %p71 = scmp.ne.s32.totalorder %s63, %s65
      %p72 = scmp.eq.s32.totalorder %s20, 1
      %p73 = por %p71, %p72
      %p74 = scmp.ne.s32.totalorder %s65, %s66
      %p75 = scmp.eq.s32.totalorder %s20, 0
      %p76 = por %p74, %p75
      %p77 = scmp.ne.s32.totalorder %s65, %s66
      %p78 = scmp.eq.s32.totalorder %s21, 1
      %p79 = por %p77, %p78
      %p81 = scmp.ne.s32.totalorder %s66, %s80
      %p82 = scmp.eq.s32.totalorder %s21, 0
      %p83 = por %p81, %p82
      %s84 = ssub.s32 %s24, %s33
      %s85 = ssub.s32 %s22, %s41
      %s86 = sor.u32 %s84, %s85
      %s87 = ssub.s32 %s23, %s37
      %s88 = sor.u32 %s86, %s87
      %p89 = scmp.eq.s32.totalorder %s88, 0
      %s91 = sadd.s32 %s90, 1
      %s92 = scalar_select %p89, %s90, %s91
      %p95 = pneg %p89
      %p96 = scmp.eq.s32.totalorder %s15, 1
      %p97 = por %p95, %p96
      %p98 = scmp.ne.s32.totalorder %s90, %s93
      %p99 = scmp.eq.s32.totalorder %s15, 0
      %p100 = por %p98, %p99
      %p101 = scmp.ne.s32.totalorder %s90, %s93
      %p102 = scmp.eq.s32.totalorder %s20, 1
      %p103 = por %p101, %p102
      %p104 = scmp.ne.s32.totalorder %s93, %s94
      %p105 = scmp.eq.s32.totalorder %s20, 0
      %p106 = por %p104, %p105
      %p107 = scmp.ne.s32.totalorder %s93, %s94
      %p108 = scmp.eq.s32.totalorder %s21, 1
      %p109 = por %p107, %p108
      %p111 = scmp.ne.s32.totalorder %s94, %s110
      %p112 = scmp.eq.s32.totalorder %s21, 0
      %p113 = por %p111, %p112
      %s114 = ssub.s32 %s24, %s33
      %s115 = ssub.s32 %s22, %s41
      %s116 = sor.u32 %s114, %s115
      %s117 = ssub.s32 %s23, %s37
      %s118 = sor.u32 %s116, %s117
      %p119 = scmp.eq.s32.totalorder %s118, 0
      %s121 = sadd.s32 %s120, 1
      %s122 = scalar_select %p119, %s120, %s121
      %p125 = pneg %p119
      %p126 = scmp.eq.s32.totalorder %s15, 1
      %p127 = por %p125, %p126
      %p128 = scmp.ne.s32.totalorder %s120, %s123
      %p129 = scmp.eq.s32.totalorder %s15, 0
      %p130 = por %p128, %p129
      %p131 = scmp.ne.s32.totalorder %s120, %s123
      %p132 = scmp.eq.s32.totalorder %s20, 1
      %p133 = por %p131, %p132
      %p134 = scmp.ne.s32.totalorder %s123, %s124
      %p135 = scmp.eq.s32.totalorder %s20, 0
      %p136 = por %p134, %p135
      %p137 = scmp.ne.s32.totalorder %s123, %s124
      %p138 = scmp.eq.s32.totalorder %s21, 1
      %p139 = por %p137, %p138
      %p141 = scmp.ne.s32.totalorder %s124, %s140
      %p142 = scmp.eq.s32.totalorder %s21, 0
      %p143 = por %p141, %p142
      %p144 = scmp.le.s32.totalorder 1, %s15
      %p145 = scmp.lt.s32.totalorder %s15, 3
      %p146 = pnand %p144, %p145
      %p147 = pneg %p146
      // Predicated region
      $region9: #{tpu_custom_call.1} parent=5 // pred_check
        _
      $region10: #{tpu_custom_call.1} parent=5 // pred_check_branch
        %149 = sbr.rel (%p146) target = $region12
      $region11: #{tpu_custom_call.1} parent=5 // pred_region
        %s150 = ssub.s32 %s15, 1
        // Predicated region
        $region13: #{tpu_custom_call.1} parent=11 // pred_check
          %p151 = pneg %p55
        $region14: #{tpu_custom_call.1} parent=11 // pred_check_branch
          %153 = sbr.rel (%p151) target = $region16
        $region15: #{tpu_custom_call.1} parent=11 // pred_region
          _
        $region16: #{tpu_custom_call.1} parent=11 // pred_fallthru
          _
        // Predicated region
        $region17: #{tpu_custom_call.1} parent=11 // pred_check
          %p154 = pneg %p76
        $region18: #{tpu_custom_call.1} parent=11 // pred_check_branch
          %156 = sbr.rel (%p154) target = $region20
        $region19: #{tpu_custom_call.1} parent=11 // pred_region
          _
        $region20: #{tpu_custom_call.1} parent=11 // pred_fallthru
          _
      $region12: #{tpu_custom_call.1} parent=5 // pred_fallthru
        _
      %p157 = scmp.lt.s32.totalorder %s15, 2
      // Predicated region
      $region21: #{tpu_custom_call.1} parent=5 // pred_check
        %p158 = pneg %p157
      $region22: #{tpu_custom_call.1} parent=5 // pred_check_branch
        %160 = sbr.rel (%p158) target = $region24
      $region23: #{tpu_custom_call.1} parent=5 // pred_region
        // Predicated region
        $region25: #{tpu_custom_call.1} parent=23 // pred_check
          %p161 = pneg %p100
        $region26: #{tpu_custom_call.1} parent=23 // pred_check_branch
          %163 = sbr.rel (%p161) target = $region28
        $region27: #{tpu_custom_call.1} parent=23 // pred_region
          %s164 = sand.u32 %s90, 1
          %s165 = scalar_lea.sflag [#allocation4], %s164
          %s166 = sand.u32 %s90, 1
          %s167 = smul.addr %s166, 64
          %s168 = scalar_lea.vmem [#allocation3], %s167
          %s169 = smul.u32 8, %s24
          %171 = vsyncadd %s165, 0
          %s172 = sadd.s32 %s23, %s22
          %s173 = smul.addr %s169, 2
          %s174 = sadd.s32 %s172, %s173
          %s175 = smul.addr %s174, 8
          %s176 = scalar_lea.hbm %s2, %s175
          %s177 = sshll.u32 %s176, 4
          %s178 = int_to_ptr.hbm [resolvable:$true] %s177
          %s179 = sshll.u32 %s168, 4
          %s180 = int_to_ptr.vmem [resolvable:$true] %s179
          %185 = dma.hbm_to_vmem [thread:$0]  %s178, 1024, %s180, %s165, 256, 128, 8
        $region28: #{tpu_custom_call.1} parent=23 // pred_fallthru
          _
      $region24: #{tpu_custom_call.1} parent=5 // pred_fallthru
        _
      %p186 = scmp.le.s32.totalorder 1, %s15
      %p187 = scmp.lt.s32.totalorder %s15, 3
      %p188 = pnand %p186, %p187
      %p189 = pneg %p188
      // Predicated region
      $region29: #{tpu_custom_call.1} parent=5 // pred_check
        _
      $region30: #{tpu_custom_call.1} parent=5 // pred_check_branch
        %191 = sbr.rel (%p188) target = $region32
      $region31: #{tpu_custom_call.1} parent=5 // pred_region
        %s192 = ssub.s32 %s15, 1
        %s193 = sand.u32 %s93, 1
        %s194 = scalar_lea.sflag [#allocation4], %s193
        %s195 = sand.u32 %s93, 1
        %s196 = smul.addr %s195, 64
        %s197 = scalar_lea.vmem [#allocation3], %s196
        // Predicated region
        $region33: #{tpu_custom_call.1} parent=31 // pred_check
          %p198 = pneg %p106
        $region34: #{tpu_custom_call.1} parent=31 // pred_check_branch
          %200 = sbr.rel (%p198) target = $region36
        $region35: #{tpu_custom_call.1} parent=31 // pred_region
          %202 = dma.done %s194, 1024
        $region36: #{tpu_custom_call.1} parent=31 // pred_fallthru
          _
        %p203 = pneg %p55
        %p204 = pneg %p52
        %p205 = pneg %p76
        %p206 = pneg %p73
        %s207 = sand.u32 %s93, 1
        %s208 = scalar_lea.sflag [#allocation4], %s207
        %s209 = sand.u32 %s93, 1
        %s210 = smul.addr %s209, 64
        %s211 = scalar_lea.vmem [#allocation3], %s210
        %p212 = pneg %p106
        %p213 = pneg %p103
        %p214 = pneg %p136
        %p215 = pneg %p133
        %s216 = sand.u32 %s123, 1
        %s217 = scalar_lea.sflag [#allocation5], %s216
        %s218 = sand.u32 %s123, 1
        %s219 = smul.addr %s218, 64
        %s220 = scalar_lea.vmem [#allocation6], %s219
        %s221 = smul.u32 8, %s27
        %s222 = smul.u32 8, %s27
        %p223 = scmp.eq.s32.totalorder %s27, 0
        // Predicated region
        $region37: #{tpu_custom_call.1} parent=31 // pred_check
          %p224 = pneg %p223
        $region38: #{tpu_custom_call.1} parent=31 // pred_check_branch
          %226 = sbr.rel (%p224) target = $region40
        $region39: #{tpu_custom_call.1} parent=31 // pred_region
          %227 = vst [vmem:[#allocation2] sm:$0xff] 0.0
        $region40: #{tpu_custom_call.1} parent=31 // pred_fallthru
          _
        %v228 = vld [vmem:[%s0] sm:$0xff]
        %230 = vset.pattern.permute.xlu0 0
        %231 = vperm.xlu0 %230, %v228
        %v232 = vpop.permute.xlu0 %231
        %s234 = scalar_lea.vmem %s0, 8
        %v235 = vld [vmem:[%s234] sm:$0xff]
        %237 = vset.pattern.permute.xlu0 0
        %238 = vperm.xlu0 %237, %v235
        %v239 = vpop.permute.xlu0 %238
        %s241 = scalar_lea.vmem %s0, 16
        %v242 = vld [vmem:[%s241] sm:$0xff]
        %244 = vset.pattern.permute.xlu0 0
        %245 = vperm.xlu0 %244, %v242
        %v246 = vpop.permute.xlu0 %245
        %s248 = scalar_lea.vmem %s0, 24
        %v249 = vld [vmem:[%s248] sm:$0xff]
        %251 = vset.pattern.permute.xlu0 0
        %252 = vperm.xlu0 %251, %v249
        %v253 = vpop.permute.xlu0 %252
        %v255 = vld [vmem:[#allocation2] sm:$0xff]
        %v256 = vadd.f32 %v255, %v239
        %vm257 = vcmp.gt.f32.partialorder %v256, 0.0
        %s258 = smul.u32 %s27, 8
        %v259 = vld [vmem:[%s197] sm:$0xff]
        %s260 = smul.u32 %s258, 8
        %s261 = scalar_lea.vmem %s1, %s260
        %v262 = vld [vmem:[%s261] sm:$0xff]
        %264 = vset.pattern.permute.xlu0 0
        %265 = vperm.xlu0 %264, %v262
        %v266 = vpop.permute.xlu0 %265
        %v268 = vmul.f32 %v259, %v266
        %v269 = vadd.f32 %v268, %v246
        %v270 = vadd.f32 %v269, %v253
        %v271 = vmul.f32 %v232, %v255
        %v272 = vadd.f32 %v271, %v246
        %v273 = vadd.f32 %v272, %v268
        %v274 = vsel %vm257, %v270, %v273
        %v275 = vadd.f32 %v274, %v239
        %vm276 = vcmp.gt.f32.partialorder %v275, 0.0
        %v277 = vsel %vm276, 1, 0
        %v278 = vcvt.s32.f32 %v277
        %279 = vst [vmem:[%s220] sm:$0xff] %v278
        %s280 = scalar_lea.vmem %s197, 8 [#allocation3]
        %v281 = vld [vmem:[%s280] sm:$0xff]
        %s282 = sadd.s32 %s258, 1
        %s283 = smul.u32 %s282, 8
        %s284 = scalar_lea.vmem %s1, %s283
        %v285 = vld [vmem:[%s284] sm:$0xff]
        %287 = vset.pattern.permute.xlu0 0
        %288 = vperm.xlu0 %287, %v285
        %v289 = vpop.permute.xlu0 %288
        %v291 = vmul.f32 %v281, %v289
        %v292 = vadd.f32 %v291, %v246
        %v293 = vadd.f32 %v292, %v253
        %v294 = vmul.f32 %v232, %v274
        %v295 = vadd.f32 %v294, %v246
        %v296 = vadd.f32 %v295, %v291
        %v297 = vsel %vm276, %v293, %v296
        %v298 = vadd.f32 %v297, %v239
        %vm299 = vcmp.gt.f32.partialorder %v298, 0.0
        %v300 = vsel %vm299, 1, 0
        %v301 = vcvt.s32.f32 %v300
        %s302 = scalar_lea.vmem %s220, 8 [#allocation6]
        %303 = vst [vmem:[%s302] sm:$0xff] %v301
        %s304 = scalar_lea.vmem %s197, 16 [#allocation3]
        %v305 = vld [vmem:[%s304] sm:$0xff]
        %s306 = sadd.s32 %s258, 2
        %s307 = smul.u32 %s306, 8
        %s308 = scalar_lea.vmem %s1, %s307
        %v309 = vld [vmem:[%s308] sm:$0xff]
        %311 = vset.pattern.permute.xlu0 0
        %312 = vperm.xlu0 %311, %v309
        %v313 = vpop.permute.xlu0 %312
        %v315 = vmul.f32 %v305, %v313
        %v316 = vadd.f32 %v315, %v246
        %v317 = vadd.f32 %v316, %v253
        %v318 = vmul.f32 %v232, %v297
        %v319 = vadd.f32 %v318, %v246
        %v320 = vadd.f32 %v319, %v315
        %v321 = vsel %vm299, %v317, %v320
        %v322 = vadd.f32 %v321, %v239
        %vm323 = vcmp.gt.f32.partialorder %v322, 0.0
        %v324 = vsel %vm323, 1, 0
        %v325 = vcvt.s32.f32 %v324
        %s326 = scalar_lea.vmem %s220, 16 [#allocation6]
        %327 = vst [vmem:[%s326] sm:$0xff] %v325
        %s328 = scalar_lea.vmem %s197, 24 [#allocation3]
        %v329 = vld [vmem:[%s328] sm:$0xff]
        %s330 = sadd.s32 %s258, 3
        %s331 = smul.u32 %s330, 8
        %s332 = scalar_lea.vmem %s1, %s331
        %v333 = vld [vmem:[%s332] sm:$0xff]
        %335 = vset.pattern.permute.xlu0 0
        %336 = vperm.xlu0 %335, %v333
        %v337 = vpop.permute.xlu0 %336
        %v339 = vmul.f32 %v329, %v337
        %v340 = vadd.f32 %v339, %v246
        %v341 = vadd.f32 %v340, %v253
        %v342 = vmul.f32 %v232, %v321
        %v343 = vadd.f32 %v342, %v246
        %v344 = vadd.f32 %v343, %v339
        %v345 = vsel %vm323, %v341, %v344
        %v346 = vadd.f32 %v345, %v239
        %vm347 = vcmp.gt.f32.partialorder %v346, 0.0
        %v348 = vsel %vm347, 1, 0
        %v349 = vcvt.s32.f32 %v348
        %s350 = scalar_lea.vmem %s220, 24 [#allocation6]
        %351 = vst [vmem:[%s350] sm:$0xff] %v349
        %s352 = scalar_lea.vmem %s197, 32 [#allocation3]
        %v353 = vld [vmem:[%s352] sm:$0xff]
        %s354 = sadd.s32 %s258, 4
        %s355 = smul.u32 %s354, 8
        %s356 = scalar_lea.vmem %s1, %s355
        %v357 = vld [vmem:[%s356] sm:$0xff]
        %359 = vset.pattern.permute.xlu0 0
        %360 = vperm.xlu0 %359, %v357
        %v361 = vpop.permute.xlu0 %360
        %v363 = vmul.f32 %v353, %v361
        %v364 = vadd.f32 %v363, %v246
        %v365 = vadd.f32 %v364, %v253
        %v366 = vmul.f32 %v232, %v345
        %v367 = vadd.f32 %v366, %v246
        %v368 = vadd.f32 %v367, %v363
        %v369 = vsel %vm347, %v365, %v368
        %v370 = vadd.f32 %v369, %v239
        %vm371 = vcmp.gt.f32.partialorder %v370, 0.0
        %v372 = vsel %vm371, 1, 0
        %v373 = vcvt.s32.f32 %v372
        %s374 = scalar_lea.vmem %s220, 32 [#allocation6]
        %375 = vst [vmem:[%s374] sm:$0xff] %v373
        %s376 = scalar_lea.vmem %s197, 40 [#allocation3]
        %v377 = vld [vmem:[%s376] sm:$0xff]
        %s378 = sadd.s32 %s258, 5
        %s379 = smul.u32 %s378, 8
        %s380 = scalar_lea.vmem %s1, %s379
        %v381 = vld [vmem:[%s380] sm:$0xff]
        %383 = vset.pattern.permute.xlu0 0
        %384 = vperm.xlu0 %383, %v381
        %v385 = vpop.permute.xlu0 %384
        %v387 = vmul.f32 %v377, %v385
        %v388 = vadd.f32 %v387, %v246
        %v389 = vadd.f32 %v388, %v253
        %v390 = vmul.f32 %v232, %v369
        %v391 = vadd.f32 %v390, %v246
        %v392 = vadd.f32 %v391, %v387
        %v393 = vsel %vm371, %v389, %v392
        %v394 = vadd.f32 %v393, %v239
        %vm395 = vcmp.gt.f32.partialorder %v394, 0.0
        %v396 = vsel %vm395, 1, 0
        %v397 = vcvt.s32.f32 %v396
        %s398 = scalar_lea.vmem %s220, 40 [#allocation6]
        %399 = vst [vmem:[%s398] sm:$0xff] %v397
        %s400 = scalar_lea.vmem %s197, 48 [#allocation3]
        %v401 = vld [vmem:[%s400] sm:$0xff]
        %s402 = sadd.s32 %s258, 6
        %s403 = smul.u32 %s402, 8
        %s404 = scalar_lea.vmem %s1, %s403
        %v405 = vld [vmem:[%s404] sm:$0xff]
        %407 = vset.pattern.permute.xlu0 0
        %408 = vperm.xlu0 %407, %v405
        %v409 = vpop.permute.xlu0 %408
        %v411 = vmul.f32 %v401, %v409
        %v412 = vadd.f32 %v411, %v246
        %v413 = vadd.f32 %v412, %v253
        %v414 = vmul.f32 %v232, %v393
        %v415 = vadd.f32 %v414, %v246
        %v416 = vadd.f32 %v415, %v411
        %v417 = vsel %vm395, %v413, %v416
        %v418 = vadd.f32 %v417, %v239
        %vm419 = vcmp.gt.f32.partialorder %v418, 0.0
        %v420 = vsel %vm419, 1, 0
        %v421 = vcvt.s32.f32 %v420
        %s422 = scalar_lea.vmem %s220, 48 [#allocation6]
        %423 = vst [vmem:[%s422] sm:$0xff] %v421
        %s424 = scalar_lea.vmem %s197, 56 [#allocation3]
        %v425 = vld [vmem:[%s424] sm:$0xff]
        %s426 = sadd.s32 %s258, 7
        %s427 = smul.u32 %s426, 8
        %s428 = scalar_lea.vmem %s1, %s427
        %v429 = vld [vmem:[%s428] sm:$0xff]
        %431 = vset.pattern.permute.xlu0 0
        %432 = vperm.xlu0 %431, %v429
        %v433 = vpop.permute.xlu0 %432
        %v435 = vmul.f32 %v425, %v433
        %v436 = vadd.f32 %v435, %v246
        %v437 = vadd.f32 %v436, %v253
        %v438 = vmul.f32 %v232, %v417
        %v439 = vadd.f32 %v438, %v246
        %v440 = vadd.f32 %v439, %v435
        %v441 = vsel %vm419, %v437, %v440
        %v442 = vadd.f32 %v441, %v239
        %vm443 = vcmp.gt.f32.partialorder %v442, 0.0
        %v444 = vsel %vm443, 1, 0
        %v445 = vcvt.s32.f32 %v444
        %s446 = scalar_lea.vmem %s220, 56 [#allocation6]
        %447 = vst [vmem:[%s446] sm:$0xff] %v445
        %448 = vst [vmem:[#allocation2] sm:$0xff] %v441
        %s449 = sand.u32 %s123, 1
        %s450 = scalar_lea.sflag [#allocation5], %s449
        %s451 = sand.u32 %s123, 1
        %s452 = smul.addr %s451, 64
        %s453 = scalar_lea.vmem [#allocation6], %s452
        // Predicated region
        $region41: #{tpu_custom_call.1} parent=31 // pred_check
          %p454 = pneg %p133
        $region42: #{tpu_custom_call.1} parent=31 // pred_check_branch
          %456 = sbr.rel (%p454) target = $region44
        $region43: #{tpu_custom_call.1} parent=31 // pred_region
          %s457 = smul.u32 8, %s27
          %459 = vsyncadd %s450, 0
          %s460 = sadd.s32 %s26, %s25
          %s461 = smul.addr %s457, 2
          %s462 = sadd.s32 %s460, %s461
          %s463 = smul.addr %s462, 8
          %s464 = scalar_lea.hbm %s3, %s463
          %s465 = sshll.u32 %s453, 4
          %s466 = int_to_ptr.vmem [resolvable:$true] %s465
          %s467 = sshll.u32 %s464, 4
          %s468 = int_to_ptr.hbm [resolvable:$true] %s467
          %473 = dma.vmem_to_hbm [thread:$0]  %s466, 1024, %s468, %s450, 128, 256, 8
        $region44: #{tpu_custom_call.1} parent=31 // pred_fallthru
          _
      $region32: #{tpu_custom_call.1} parent=5 // pred_fallthru
        _
      %p474 = scmp.le.s32.totalorder 2, %s15
      // Predicated region
      $region45: #{tpu_custom_call.1} parent=5 // pred_check
        %p475 = pneg %p474
      $region46: #{tpu_custom_call.1} parent=5 // pred_check_branch
        %477 = sbr.rel (%p475) target = $region48
      $region47: #{tpu_custom_call.1} parent=5 // pred_region
        %s478 = ssub.s32 %s15, 2
        // Predicated region
        $region49: #{tpu_custom_call.1} parent=47 // pred_check
          %p479 = pneg %p139
        $region50: #{tpu_custom_call.1} parent=47 // pred_check_branch
          %481 = sbr.rel (%p479) target = $region52
        $region51: #{tpu_custom_call.1} parent=47 // pred_region
          %s482 = sand.u32 %s124, 1
          %s483 = scalar_lea.sflag [#allocation5], %s482
          %s484 = sand.u32 %s124, 1
          %s485 = smul.addr %s484, 64
          %s486 = scalar_lea.vmem [#allocation6], %s485
          %488 = dma.done %s483, 1024
        $region52: #{tpu_custom_call.1} parent=47 // pred_fallthru
          _
      $region48: #{tpu_custom_call.1} parent=5 // pred_fallthru
        _
    $region6: #{tpu_custom_call.1} parent=1 // loop_footer
      %s19 = sadd.s32 1, %s15
    $region7: #{tpu_custom_call.1} parent=1 // loop_footer_branch
      %14 = sbr.rel target = $region3
    $region8: #{tpu_custom_call.1} parent=1 // loop_exit
      _
    %489 = vsyncpa [#allocation4], 1
    %s490 = scalar_lea.sflag [#allocation4], 1
    %491 = vsyncpa %s490, 1
    %492 = vsyncpa [#allocation5], 1
    %s493 = scalar_lea.sflag [#allocation5], 1
    %494 = vsyncpa %s493, 1

</llo_original>
